<compile_context>
chip_gen: v7x
topology: tpu7x:2x2x1
jax: 0.10.0
libtpu: 0.0.40
codegen_flags: <defaults>
</compile_context>

<pallas_src>
import math

import jax
import jax.numpy as jnp
import numpy as np
from jax.experimental import pallas as pl
from jax.experimental.pallas import tpu as pltpu


def _vector_input_norm_kernel(x_ref, mean_ref, scale_ref, o_ref):
    # x_ref:     VMEM (TB, FF)     -- batch tile (caller dtype; cast here)
    # mean_ref:  VMEM (1, FF) f32  -- running mean (lane-folded)
    # scale_ref: VMEM (1, FF) f32  -- 1/sqrt(running_variance/steps) (lane-folded)
    # o_ref:     VMEM (TB, FF)     -- out_dtype
    x = x_ref[...].astype(jnp.float32)
    y = jnp.clip((x - mean_ref[...]) * scale_ref[...], -5.0, 5.0)
    o_ref[...] = y.astype(o_ref.dtype)


def _round_up(n: int, m: int) -> int:
    return ((n + m - 1) // m) * m


def vector_input_forward(x, running_mean, running_variance, normalization_steps,
                         *, out_dtype=None, tile_rows=None):
    """Pallas forward of VectorInput with a Normalizer attached.

    x: [B, F] (any float dtype; cast to f32 inside the kernel).
    out_dtype: None -> match x.dtype (fewest HBM bytes); pass jnp.float32 for
      exact torch-promotion parity.
    """
    B, F = x.shape
    out_dtype = np.dtype(x.dtype if out_dtype is None else out_dtype)

    steps = jnp.asarray(normalization_steps, dtype=jnp.float32)
    mean = running_mean.astype(jnp.float32).reshape(1, F)
    var = running_variance.astype(jnp.float32).reshape(1, F)
    # Precompute scale = 1/sqrt(var/steps): tiny F-length XLA prep, keeps the
    # kernel body to sub + mul + clip (fewer VPU ops / vregs per tile).
    scale = 1.0 / jnp.sqrt(var / steps)

    # --- Lane-density folding: fold g = lcm(F,128)//F batch rows into the
    # lane axis whenever F is not already a multiple of 128, padding B up to
    # a multiple of g when the overhead is modest. Guarantees unmasked,
    # lane-dense stores (the biggest single measured lever for elementwise).
    g = 1
    if F % 128 != 0:
        g_full = 128 // math.gcd(F, 128)           # lcm(F, 128) // F
        if B % g_full == 0 or B >= 8 * g_full:     # pad overhead <= 12.5%
            g = g_full

    if g > 1:
        B_pad = _round_up(B, g)
        x_fold = jnp.pad(x, ((0, B_pad - B), (0, 0))) if B_pad != B else x
        Bf, Ff = B_pad // g, F * g
        x_fold = x_fold.reshape(Bf, Ff)
        mean_f = jnp.tile(mean, (1, g))
        scale_f = jnp.tile(scale, (1, g))
    else:
        B_pad, Bf, Ff = B, B, F
        x_fold, mean_f, scale_f = x, mean, scale

    # --- Row tile sizing. Target ~4 MiB of combined (in + out) bytes per grid
    # step; clamp so double-buffered in+out <= 12 MiB (fits every generation's
    # scoped-VMEM default with headroom, and v7x's 64 MiB physical VMEM).
    in_item = x.dtype.itemsize
    out_item = out_dtype.itemsize
    row_bytes = Ff * (in_item + out_item)
    target_bytes = 4 << 20
    budget_bytes = 12 << 20
    max_rows = max(16, ((budget_bytes // 2) // row_bytes) // 16 * 16)

    if tile_rows is None:
        cand = max(16, (target_bytes // row_bytes) // 16 * 16)
    else:
        cand = max(8, (int(tile_rows) // 8) * 8)   # caller-supplied, still clamped
    cand = min(cand, max_rows)

    if cand >= Bf:
        if Bf >= 32:
            # Guarantee >= 2 grid steps so "parallel" can engage both v7x TCs.
            tb = min(Bf, _round_up(pl.cdiv(Bf, 2), 16))
            if tb >= Bf:
                tb = Bf
        else:
            tb = Bf
    else:
        tb = cand
    grid = (pl.cdiv(Bf, tb),)

    # Explicit scoped-VMEM limit: 2x double-buffered (in + out) tiles + params.
    vmem_needed = 2 * tb * Ff * (in_item + out_item) + 4 * Ff * 4
    vmem_limit = int(min(32 << 20, max(vmem_needed + (4 << 20), 16 << 20)))

    out_f = pl.pallas_call(
        _vector_input_norm_kernel,
        out_shape=jax.ShapeDtypeStruct((Bf, Ff), out_dtype),
        grid=grid,
        in_specs=[
            pl.BlockSpec((tb, Ff), lambda i: (i, 0)),   # x tile (pipelined)
            pl.BlockSpec((1, Ff), lambda i: (0, 0)),    # running mean (folded)
            pl.BlockSpec((1, Ff), lambda i: (0, 0)),    # scale (folded)
        ],
        out_specs=pl.BlockSpec((tb, Ff), lambda i: (i, 0)),
        compiler_params=pltpu.CompilerParams(
            dimension_semantics=("parallel",),          # v7x: shard across 2 TCs
            vmem_limit_bytes=vmem_limit,
        ),
    )(x_fold, mean_f, scale_f)

    out = out_f.reshape(B_pad, F)
    if B_pad != B:
        out = out[:B]
    return out


def _vector_input_forward_jnp(x, running_mean, running_variance,
                              normalization_steps, out_dtype=None):
    """Plain-jnp fallback for tiny inputs (launch overhead > work)."""
    steps = jnp.asarray(normalization_steps, dtype=jnp.float32)
    y = jnp.clip(
        (x.astype(jnp.float32) - running_mean) / jnp.sqrt(running_variance / steps),
        -5.0, 5.0)
    return y.astype(x.dtype if out_dtype is None else out_dtype)


class VectorInput:
    """JAX/Pallas port of mlagents VectorInput (forward pass in-kernel)."""

    def __init__(self, input_size: int, normalize: bool = False,
                 min_pallas_elements: int = 1 << 14,
                 out_dtype=jnp.float32):           # f32 default = torch parity
        self.input_size = input_size
        self.normalize = normalize
        self.min_pallas_elements = min_pallas_elements
        self.out_dtype = out_dtype
        if normalize:
            # Buffers exactly as in Normalizer.__init__ (deterministic).
            self.normalization_steps = jnp.asarray(1, dtype=jnp.int32)
            self.running_mean = jnp.zeros((input_size,), dtype=jnp.float32)
            self.running_variance = jnp.ones((input_size,), dtype=jnp.float32)

    def update_normalization(self, vector_input):
        # Plain-JAX glue replicating Normalizer.update (buffer bookkeeping,
        # not the forward hot path).
        if not self.normalize:
            return
        steps_increment = vector_input.shape[0]
        total_new_steps = self.normalization_steps + steps_increment
        input_to_old_mean = vector_input - self.running_mean
        new_mean = self.running_mean + (
            input_to_old_mean / total_new_steps.astype(jnp.float32)
        ).sum(0)
        input_to_new_mean = vector_input - new_mean
        new_variance = self.running_variance + (
            input_to_new_mean * input_to_old_mean
        ).sum(0)
        self.running_mean = new_mean
        self.running_variance = new_variance
        self.normalization_steps = total_new_steps

    def __call__(self, inputs):
        if not self.normalize:
            return inputs  # identity path, nothing to compute
        if inputs.size < self.min_pallas_elements:
            return _vector_input_forward_jnp(
                inputs, self.running_mean, self.running_variance,
                self.normalization_steps, out_dtype=self.out_dtype)
        return vector_input_forward(
            inputs, self.running_mean, self.running_variance,
            self.normalization_steps, out_dtype=self.out_dtype)


if __name__ == "__main__":
    key = jax.random.PRNGKey(0)
    B, F = 64, 32  # small shapes: batch=64, vec_obs_size=32

    k1, k2, k3, k4 = jax.random.split(key, 4)
    x = jax.random.normal(k1, (B, F), dtype=jnp.float32) * 3.0 + 1.0

    # min_pallas_elements=0 -> force the Pallas path even at demo size.
    module = VectorInput(input_size=F, normalize=True, min_pallas_elements=0)
    # One deterministic update so running stats are non-trivial.
    stats_batch = jax.random.normal(k2, (16, F), dtype=jnp.float32) * 2.0 - 0.5
    module.update_normalization(stats_batch)

    steps_f = module.normalization_steps.astype(jnp.float32)

    def reference(xx):
        return jnp.clip(
            (xx.astype(jnp.float32) - module.running_mean)
            / jnp.sqrt(module.running_variance / steps_f), -5.0, 5.0)

    # 1) Main f32 path (class: torch-parity f32 output).
    out = jax.block_until_ready(module(x))
    assert out.shape == (B, F) and out.dtype == jnp.float32
    assert jnp.allclose(out, reference(x), atol=1e-5, rtol=1e-5)

    # 2) Multi-step gridded pipeline via caller tile_rows (grid of 2).
    out_grid = jax.block_until_ready(
        vector_input_forward(x, module.running_mean, module.running_variance,
                             module.normalization_steps,
                             out_dtype=jnp.float32, tile_rows=8))
    assert jnp.allclose(out_grid, reference(x), atol=1e-5, rtol=1e-5)

    # 3) lcm-based lane fold (F=48 -> g=8) + auto >=2-step grid.
    F2, B2 = 48, 512
    mean2 = jax.random.normal(k3, (F2,), dtype=jnp.float32)
    var2 = jax.random.uniform(k3, (F2,), dtype=jnp.float32, minval=0.5, maxval=2.0)
    x2 = jax.random.normal(k3, (B2, F2), dtype=jnp.float32) * 2.0
    out2 = jax.block_until_ready(
        vector_input_forward(x2, mean2, var2, jnp.asarray(5, jnp.int32),
                             out_dtype=jnp.float32))
    ref2 = jnp.clip((x2 - mean2) / jnp.sqrt(var2 / 5.0), -5.0, 5.0)
    assert jnp.allclose(out2, ref2, atol=1e-5, rtol=1e-5)

    # 4) Fold with batch padding (B=70 not divisible by g=4; padded then sliced).
    x3 = jax.random.normal(k4, (70, F), dtype=jnp.float32) * 2.0 + 0.3
    out3 = jax.block_until_ready(
        vector_input_forward(x3, module.running_mean, module.running_variance,
                             module.normalization_steps, out_dtype=jnp.float32))
    assert out3.shape == (70, F)
    assert jnp.allclose(out3, reference(x3), atol=1e-5, rtol=1e-5)

    # 5) No-fold fallback (odd F -> masked-store path, still correct).
    F4 = 33
    x4 = jax.random.normal(k4, (64, F4), dtype=jnp.float32)
    mean4 = jnp.zeros((F4,), jnp.float32)
    var4 = jnp.ones((F4,), jnp.float32)
    out4 = jax.block_until_ready(
        vector_input_forward(x4, mean4, var4, jnp.asarray(1, jnp.int32),
                             out_dtype=jnp.float32))
    assert jnp.allclose(out4, jnp.clip(x4, -5.0, 5.0), atol=1e-5, rtol=1e-5)

    # 6) bf16 in -> bf16 out (byte-saving path: cast in-kernel, narrow output).
    x_bf16 = x.astype(jnp.bfloat16)
    out_bf16 = jax.block_until_ready(
        vector_input_forward(x_bf16, module.running_mean,
                             module.running_variance,
                             module.normalization_steps))   # out_dtype=None -> bf16
    assert out_bf16.dtype == jnp.bfloat16
    ref_bf16 = reference(x_bf16)
    assert jnp.allclose(out_bf16.astype(jnp.float32), ref_bf16,
                        atol=5e-2, rtol=2e-2)

    # 7) normalize=False (identity) path.
    ident = VectorInput(input_size=F, normalize=False)(x)
    assert jnp.allclose(ident, x)

    print("KERNEL_OK")
</pallas_src>

<mosaic_0001>
module attributes {stable_mosaic.version = 11 : i64} {
  func.func @_vector_input_norm_kernel(%arg0: i32, %arg1: memref<16x128xf32, #tpu.memory_space<vmem>>, %arg2: memref<1x128xf32, #tpu.memory_space<vmem>>, %arg3: memref<1x128xf32, #tpu.memory_space<vmem>>, %arg4: memref<16x128xf32, #tpu.memory_space<vmem>>) attributes {dimension_semantics = [#tpu.dimension_semantics<parallel>], iteration_bounds = array<i64: 1>, scalar_prefetch = 0 : i64, scratch_operands = 0 : i64, tpu.core_type = #tpu.core_type<tc>, window_params = [{transform_indices = @transform_0, window_bounds = array<i64: 16, 128>}, {pipeline_mode = #tpu.pipeline_mode<synchronous>, transform_indices = @transform_1, window_bounds = array<i64: 1, 128>}, {pipeline_mode = #tpu.pipeline_mode<synchronous>, transform_indices = @transform_2, window_bounds = array<i64: 1, 128>}, {transform_indices = @transform_3, window_bounds = array<i64: 16, 128>}]} {
    %c0 = arith.constant 0 : index
    %c0_0 = arith.constant 0 : index
    %0 = vector.load %arg1[%c0, %c0_0] : memref<16x128xf32, #tpu.memory_space<vmem>>, vector<16x128xf32>
    %c0_1 = arith.constant 0 : index
    %c0_2 = arith.constant 0 : index
    %1 = vector.load %arg2[%c0_1, %c0_2] : memref<1x128xf32, #tpu.memory_space<vmem>>, vector<1x128xf32>
    %2 = vector.broadcast %1 : vector<1x128xf32> to vector<16x128xf32>
    %3 = arith.subf %0, %2 : vector<16x128xf32>
    %c0_3 = arith.constant 0 : index
    %c0_4 = arith.constant 0 : index
    %4 = vector.load %arg3[%c0_3, %c0_4] : memref<1x128xf32, #tpu.memory_space<vmem>>, vector<1x128xf32>
    %5 = vector.broadcast %4 : vector<1x128xf32> to vector<16x128xf32>
    %6 = arith.mulf %3, %5 : vector<16x128xf32>
    %cst = arith.constant -5.000000e+00 : f32
    %cst_5 = arith.constant 5.000000e+00 : f32
    %7 = vector.broadcast %cst : f32 to vector<16x128xf32>
    %8 = arith.maximumf %7, %6 : vector<16x128xf32>
    %9 = vector.broadcast %cst_5 : f32 to vector<16x128xf32>
    %10 = arith.minimumf %9, %8 : vector<16x128xf32>
    %c0_6 = arith.constant 0 : index
    %c0_7 = arith.constant 0 : index
    %11 = vector.load %arg4[%c0_6, %c0_7] : memref<16x128xf32, #tpu.memory_space<vmem>>, vector<16x128xf32>
    tpu.vector_store %arg4[%c0_6, %c0_7], %10 {strides = array<i32>} : memref<16x128xf32, #tpu.memory_space<vmem>>, vector<16x128xf32>,
    return
  }
  func.func @transform_0(%arg0: i32) -> (i32, i32) {
    %c0_i32 = arith.constant 0 : i32
    %c0_i32_0 = arith.constant 0 : i32
    return %arg0, %c0_i32 : i32, i32
  }
  func.func @transform_1(%arg0: i32) -> (i32, i32) {
    %c0_i32 = arith.constant 0 : i32
    %c0_i32_0 = arith.constant 0 : i32
    %c0_i32_1 = arith.constant 0 : i32
    return %c0_i32, %c0_i32_0 : i32, i32
  }
  func.func @transform_2(%arg0: i32) -> (i32, i32) {
    %c0_i32 = arith.constant 0 : i32
    %c0_i32_0 = arith.constant 0 : i32
    %c0_i32_1 = arith.constant 0 : i32
    return %c0_i32, %c0_i32_0 : i32, i32
  }
  func.func @transform_3(%arg0: i32) -> (i32, i32) {
    %c0_i32 = arith.constant 0 : i32
    %c0_i32_0 = arith.constant 0 : i32
    return %arg0, %c0_i32 : i32, i32
  }
}

</mosaic_0001>

<llo_original>
// kernel: tpu_custom_call.1
$region0: #{tpu_custom_call.1}
  #allocation0 [shape = 'u32[]', space=smem, size = 0x4, offset = 0x4, fixed_abs, tag = 'smem constant byte address 0x4 - core index']
  #allocation1 [shape = 'u32[144,128]{1,0:T(1,128)}', space=vmem, size = 0x12000, scoped, tag = 'internal scratch']
  %s0 = inlined_call_operand.hbm [shape: f32[16,128], index: 0, kind: input, shape index: {}]
  %s1 = inlined_call_operand.vmem [shape: f32[1,128], index: 1, kind: input, shape index: {}]
  %s2 = inlined_call_operand.vmem [shape: f32[1,128], index: 2, kind: input, shape index: {}]
  %s3 = inlined_call_operand.hbm [shape: f32[16,128], index: 3, kind: output, shape index: {}]
  %s4 = sld [smem:[#allocation0]]
  $region26: #{tpu_custom_call.1} parent=0
    _
  %s6 = ssub.s32 1, %s4
  %s7 = scalar_select 0, %s6, %s4
  $region1: #{tpu_custom_call.1} parent=0
    #allocation2 [shape = 'u8[8192]{0}', space=vmem, size = 0x2000, scoped, tag = 'input window, operand 0, single buffered']
    #allocation3 [shape = 's32[1]{0}', space=sflag, size = 0x4, scoped, tag = 'scoped memory for tpu_custom_call.1']
    #allocation4 [shape = 's32[1]{0}', space=sflag, size = 0x4, scoped, tag = 'scoped memory for tpu_custom_call.1']
    #allocation5 [shape = 'u8[8192]{0}', space=vmem, size = 0x2000, scoped, tag = 'output window, operand 0, single buffered']
    %8 = vsyncpa [#allocation3], 0
    %9 = vsyncpa [#allocation4], 0
    // Predicated region
    $region2: #{tpu_custom_call.1} parent=1 // pred_check
      _
    $region3: #{tpu_custom_call.1} parent=1 // pred_check_branch
      %11 = sbr.rel (0) target = $region5
    $region4: #{tpu_custom_call.1} parent=1 // pred_region
      %s13 = ssub.s32 256, 256
      %14 = vsyncadd [#allocation3], %s13
      %s15 = sshll.u32 [#allocation2], 4
      %s16 = int_to_ptr.vmem [resolvable:$true] %s15
      %21 = dma.hbm_to_vmem [thread:$0]  %s0, 256, %s16, [#allocation3], 128, 128, 8
    $region5: #{tpu_custom_call.1} parent=1 // pred_fallthru
      _
    // Predicated region
    $region6: #{tpu_custom_call.1} parent=1 // pred_check
      _
    $region7: #{tpu_custom_call.1} parent=1 // pred_check_branch
      %23 = sbr.rel (0) target = $region9
    $region8: #{tpu_custom_call.1} parent=1 // pred_region
      _
    $region9: #{tpu_custom_call.1} parent=1 // pred_fallthru
      _
    // Predicated region
    $region10: #{tpu_custom_call.1} parent=1 // pred_check
      _
    $region11: #{tpu_custom_call.1} parent=1 // pred_check_branch
      %25 = sbr.rel (0) target = $region13
    $region12: #{tpu_custom_call.1} parent=1 // pred_region
      _
    $region13: #{tpu_custom_call.1} parent=1 // pred_fallthru
      _
    // Predicated region
    $region14: #{tpu_custom_call.1} parent=1 // pred_check
      _
    $region15: #{tpu_custom_call.1} parent=1 // pred_check_branch
      %27 = sbr.rel (0) target = $region17
    $region16: #{tpu_custom_call.1} parent=1 // pred_region
      %28 = dma.done [#allocation3], 256
    $region17: #{tpu_custom_call.1} parent=1 // pred_fallthru
      _
    %v29 = vld [vmem:[#allocation2] sm:$0xff]
    %v30 = vld [vmem:[#allocation2 + $0x8] sm:$0xff]
    %v31 = vld [vmem:[%s1] sm:$0x1]
    %v33 = vlaneseq
    %v34 = vshrl.u32 %v33, 7
    %v35 = vsub.s32 0, %v34
    %v36 = vrot.slane %v31, %v35
    %v38 = vsub.f32 %v29, %v36
    %v39 = vsub.f32 %v30, %v36
    %v40 = vld [vmem:[%s2] sm:$0x1]
    %v42 = vlaneseq
    %v43 = vshrl.u32 %v42, 7
    %v44 = vsub.s32 0, %v43
    %v45 = vrot.slane %v40, %v44
    %v47 = vmul.f32 %v38, %v45
    %v48 = vmul.f32 %v39, %v45
    %v49 = vmax.f32 %v47, -5.0
    %v50 = vmax.f32 %v48, -5.0
    %v51 = vmin.f32 %v49, 5.0
    %v52 = vmin.f32 %v50, 5.0
    %53 = vst [vmem:[#allocation5] sm:$0xff] %v51
    %54 = vst [vmem:[#allocation5 + $0x8] sm:$0xff] %v52
    // Predicated region
    $region18: #{tpu_custom_call.1} parent=1 // pred_check
      _
    $region19: #{tpu_custom_call.1} parent=1 // pred_check_branch
      %56 = sbr.rel (0) target = $region21
    $region20: #{tpu_custom_call.1} parent=1 // pred_region
      %s58 = ssub.s32 256, 256
      %59 = vsyncadd [#allocation4], %s58
      %s60 = sshll.u32 [#allocation5], 4
      %s61 = int_to_ptr.vmem [resolvable:$true] %s60
      %66 = dma.vmem_to_hbm [thread:$0]  %s61, 256, %s3, [#allocation4], 128, 128, 8
    $region21: #{tpu_custom_call.1} parent=1 // pred_fallthru
      _
    // Predicated region
    $region22: #{tpu_custom_call.1} parent=1 // pred_check
      _
    $region23: #{tpu_custom_call.1} parent=1 // pred_check_branch
      %68 = sbr.rel (0) target = $region25
    $region24: #{tpu_custom_call.1} parent=1 // pred_region
      %69 = dma.done [#allocation4], 256
    $region25: #{tpu_custom_call.1} parent=1 // pred_fallthru
      _
    %70 = vsyncpa [#allocation3], 1
    %71 = vsyncpa [#allocation4], 1

</llo_original>
